<compile_context>
chip_gen: v6e
topology: v6e:2x2x1
jax: 0.10.0
libtpu: 0.0.40
codegen_flags: <defaults>
</compile_context>

<pallas_src>
import jax
import jax.numpy as jnp
from jax.experimental import pallas as pl
from jax.experimental.pallas import tpu as pltpu

LN_EPS = 1e-5  # nn.LayerNorm default


def _round_up(x, m):
    return ((x + m - 1) // m) * m


def _vmem_capacity_bytes():
    try:
        return int(pltpu.get_tpu_info().vmem_capacity_bytes)
    except Exception:
        return 64 * 1024 * 1024  # conservative fallback: v7x per-TensorCore VMEM


def mlp_head_kernel(x_ref, gamma_ref, beta_ref, w_ref, b_ref, o_ref, y_ref):
    # Grid = (row_tiles, out_tiles), out axis innermost.  LayerNorm runs once
    # per row tile (j == 0) into the matmul-dtype scratch y_ref and is reused
    # for every out_dim tile.
    @pl.when(pl.program_id(1) == 0)
    def _():
        x = x_ref[...].astype(jnp.float32)                     # (bm, D)
        mean = jnp.mean(x, axis=-1, keepdims=True)             # (bm, 1)
        centered = x - mean
        var = jnp.mean(centered * centered, axis=-1, keepdims=True)
        inv_std = jax.lax.rsqrt(var + LN_EPS)                  # EUP slot
        y = (centered * inv_std) * gamma_ref[...] + beta_ref[...]
        y_ref[...] = y.astype(y_ref.dtype)                     # stored in matmul dtype

    out = jnp.dot(y_ref[...], w_ref[...], preferred_element_type=jnp.float32)
    o_ref[...] = (out + b_ref[...]).astype(o_ref.dtype)


def _choose_tiles(B, D, O, x_dtype, w_dtype, out_dtype, block_rows, block_cols, budget):
    x_it = jnp.dtype(x_dtype).itemsize
    w_it = jnp.dtype(w_dtype).itemsize
    o_it = jnp.dtype(out_dtype).itemsize
    # dtype-native sublane multiple: 8 (f32), 16 (bf16), 32 (int8/fp8).
    mult = max(8, 32 // x_it, 32 // w_it, 32 // o_it)

    def vmem_usage(bm, tn):
        return (2 * bm * D * x_it        # x tile (double-buffered stream)
                + 2 * D * tn * w_it      # W tile
                + 2 * bm * tn * o_it     # output tile
                + 4 * D * 4              # gamma + beta (f32, (1, D))
                + 2 * tn * 4             # bias tile (f32)
                + bm * D * w_it)         # LN scratch (matmul dtype)

    block_cols = _round_up(max(block_cols, 128), 128)

    # Row tile: full extent for small batches, otherwise block_rows-ish.
    bm = B if B <= block_rows else _round_up(block_rows, mult)

    # Out tile: whole-weight-resident (tn == O -> W DMA'd from HBM exactly once)
    # whenever it fits the VMEM budget; otherwise lane-dense 128-multiple tiles.
    if O <= block_cols or vmem_usage(bm, O) <= budget:
        tn = O
    else:
        tn = block_cols
    # TODO(synk): for vocab-style heads (O >> B) a flipped grid (out axis outer,
    # LN recomputed inline) would stream W exactly once; not needed at head sizes.

    # Shrink the row tile if the chosen tiles overshoot the budget.
    while bm > mult and vmem_usage(bm, tn) > budget:
        bm = max(mult, _round_up(bm // 2, mult))

    # W resident -> splitting rows costs no extra weight traffic; guarantee
    # >= 2 row tiles so the "parallel" axis can span both v7x TensorCores.
    if tn == O and bm >= B and B >= 2 * mult:
        bm = min(bm, _round_up(pl.cdiv(B, 2), mult))

    return bm, tn, vmem_usage(bm, tn)


def mlp_head(x, gamma, beta, w, b, *, block_rows=512, block_cols=256):
    """layer_norm(x) @ w + b.

    x: (B, dim).  gamma/beta: (dim,) LayerNorm affine.  w: (dim, out_dim) — the
    TRANSPOSE of PyTorch nn.Linear.weight, already in the desired matmul dtype
    (pre-cast ONCE to bf16 outside this call for the fast MXU path; LN stats
    and accumulation stay f32).  b: (out_dim,).  No per-call padding / casting
    of the weight happens here.
    """
    B, D = x.shape
    O = w.shape[1]

    cap = _vmem_capacity_bytes()
    budget = int(cap * 0.8)
    bm, tn, est = _choose_tiles(B, D, O, x.dtype, w.dtype, x.dtype,
                                block_rows, block_cols, budget)

    # Tiny (D / O element) reshapes+casts only; the big W stream is untouched.
    gamma2 = gamma.reshape(1, D).astype(jnp.float32)
    beta2 = beta.reshape(1, D).astype(jnp.float32)
    b2 = b.reshape(1, O).astype(jnp.float32)

    grid = (pl.cdiv(B, bm), pl.cdiv(O, tn))

    vmem_limit = min(max(int(est * 1.5), 32 * 1024 * 1024),
                     cap - 8 * 1024 * 1024)  # stay below physical VMEM (v7x: 64 MiB)

    return pl.pallas_call(
        mlp_head_kernel,
        out_shape=jax.ShapeDtypeStruct((B, O), x.dtype),
        grid_spec=pltpu.PrefetchScalarGridSpec(
            num_scalar_prefetch=0,
            grid=grid,
            in_specs=[
                pl.BlockSpec((bm, D), lambda i, j: (i, 0)),   # x rows
                pl.BlockSpec((1, D), lambda i, j: (0, 0)),    # gamma (grid-invariant)
                pl.BlockSpec((1, D), lambda i, j: (0, 0)),    # beta  (grid-invariant)
                pl.BlockSpec((D, tn), lambda i, j: (0, j)),   # W column tile
                pl.BlockSpec((1, tn), lambda i, j: (0, j)),   # bias tile
            ],
            out_specs=pl.BlockSpec((bm, tn), lambda i, j: (i, j)),
            scratch_shapes=[pltpu.VMEM((bm, D), w.dtype)],    # LN result, matmul dtype
        ),
        compiler_params=pltpu.CompilerParams(
            dimension_semantics=("parallel", "arbitrary"),
            vmem_limit_bytes=vmem_limit,
        ),
    )(x, gamma2, beta2, w, b2)


def mlp_head_ref(x, gamma, beta, w, b):
    xf = x.astype(jnp.float32)
    mean = jnp.mean(xf, axis=-1, keepdims=True)
    var = jnp.mean((xf - mean) ** 2, axis=-1, keepdims=True)
    xn = (xf - mean) * jax.lax.rsqrt(var + LN_EPS)
    y = xn * gamma + beta
    return (y @ w.astype(jnp.float32) + b).astype(x.dtype)


if __name__ == "__main__":
    key = jax.random.PRNGKey(0)
    B, dim, out_dim = 16, 32, 16

    k_x, k_w, k_b, k_g, k_bt = jax.random.split(key, 5)
    x = jax.random.normal(k_x, (B, dim), dtype=jnp.float32)

    # Deterministic synthetic parameters matching the module's __init__ shapes.
    # LayerNorm(dim): weight/bias (dim,); Linear(dim, out_dim): PyTorch weight
    # is (out_dim, dim) — we keep it transposed as (dim, out_dim).
    gamma = 1.0 + 0.1 * jax.random.normal(k_g, (dim,), dtype=jnp.float32)
    beta = 0.1 * jax.random.normal(k_bt, (dim,), dtype=jnp.float32)
    w = jax.random.normal(k_w, (dim, out_dim), dtype=jnp.float32) * (dim ** -0.5)
    b = 0.01 * jax.random.normal(k_b, (out_dim,), dtype=jnp.float32)

    ref = mlp_head_ref(x, gamma, beta, w, b)

    # f32 matmul path (exact parity with the reference).
    out = jax.block_until_ready(mlp_head(x, gamma, beta, w, b))
    assert out.shape == (B, out_dim), out.shape
    assert jnp.allclose(out, ref, atol=1e-4, rtol=1e-4), "f32 path mismatch"

    # bf16 matmul-input path: weight pre-cast ONCE outside the call (hoisted);
    # LN statistics and accumulation stay in f32.
    w_bf16 = w.astype(jnp.bfloat16)
    out_bf16 = jax.block_until_ready(mlp_head(x, gamma, beta, w_bf16, b))
    assert out_bf16.shape == (B, out_dim), out_bf16.shape
    assert jnp.allclose(out_bf16, ref, atol=1e-1, rtol=1e-1), "bf16 path mismatch"

    print("KERNEL_OK")
</pallas_src>

<mosaic_0001>
module attributes {stable_mosaic.version = 11 : i64} {
  func.func @mlp_head_kernel(%arg0: i32, %arg1: i32, %arg2: memref<8x32xf32, #tpu.memory_space<vmem>>, %arg3: memref<1x32xf32, #tpu.memory_space<vmem>>, %arg4: memref<1x32xf32, #tpu.memory_space<vmem>>, %arg5: memref<32x16xf32, #tpu.memory_space<vmem>>, %arg6: memref<1x16xf32, #tpu.memory_space<vmem>>, %arg7: memref<8x16xf32, #tpu.memory_space<vmem>>, %arg8: memref<8x32xf32, #tpu.memory_space<vmem>>) attributes {dimension_semantics = [#tpu.dimension_semantics<parallel>, #tpu.dimension_semantics<arbitrary>], iteration_bounds = array<i64: 2, 1>, scalar_prefetch = 0 : i64, scratch_operands = 1 : i64, tpu.core_type = #tpu.core_type<tc>, window_params = [{transform_indices = @transform_0, window_bounds = array<i64: 8, 32>}, {pipeline_mode = #tpu.pipeline_mode<synchronous>, transform_indices = @transform_1, window_bounds = array<i64: 1, 32>}, {pipeline_mode = #tpu.pipeline_mode<synchronous>, transform_indices = @transform_2, window_bounds = array<i64: 1, 32>}, {transform_indices = @transform_3, window_bounds = array<i64: 32, 16>}, {transform_indices = @transform_4, window_bounds = array<i64: 1, 16>}, {transform_indices = @transform_5, window_bounds = array<i64: 8, 16>}]} {
    %c0_i32 = arith.constant 0 : i32
    %0 = arith.cmpi eq, %arg1, %c0_i32 : i32
    %1 = arith.extui %0 : i1 to i32
    %c0_i32_0 = arith.constant 0 : i32
    %2 = arith.cmpi ne, %1, %c0_i32_0 : i32
    scf.if %2 {
      %c0_8 = arith.constant 0 : index
      %c0_9 = arith.constant 0 : index
      %10 = vector.load %arg2[%c0_8, %c0_9] : memref<8x32xf32, #tpu.memory_space<vmem>>, vector<8x32xf32>
      %cst_10 = arith.constant dense<0.000000e+00> : vector<8xf32>
      %11 = vector.multi_reduction <add>, %10, %cst_10 [1] : vector<8x32xf32> to vector<8xf32>
      %12 = vector.shape_cast %11 : vector<8xf32> to vector<8x1xf32>
      %cst_11 = arith.constant 3.200000e+01 : f32
      %13 = vector.broadcast %cst_11 : f32 to vector<8x1xf32>
      %14 = arith.divf %12, %13 : vector<8x1xf32>
      %15 = vector.broadcast %14 : vector<8x1xf32> to vector<8x32xf32>
      %16 = arith.subf %10, %15 : vector<8x32xf32>
      %17 = arith.mulf %16, %16 : vector<8x32xf32>
      %cst_12 = arith.constant dense<0.000000e+00> : vector<8xf32>
      %18 = vector.multi_reduction <add>, %17, %cst_12 [1] : vector<8x32xf32> to vector<8xf32>
      %19 = vector.shape_cast %18 : vector<8xf32> to vector<8x1xf32>
      %cst_13 = arith.constant 3.200000e+01 : f32
      %20 = vector.broadcast %cst_13 : f32 to vector<8x1xf32>
      %21 = arith.divf %19, %20 : vector<8x1xf32>
      %cst_14 = arith.constant 9.99999974E-6 : f32
      %22 = vector.broadcast %cst_14 : f32 to vector<8x1xf32>
      %23 = arith.addf %21, %22 : vector<8x1xf32>
      %24 = math.rsqrt %23 : vector<8x1xf32>
      %25 = vector.broadcast %24 : vector<8x1xf32> to vector<8x32xf32>
      %26 = arith.mulf %16, %25 : vector<8x32xf32>
      %c0_15 = arith.constant 0 : index
      %c0_16 = arith.constant 0 : index
      %27 = vector.load %arg3[%c0_15, %c0_16] : memref<1x32xf32, #tpu.memory_space<vmem>>, vector<1x32xf32>
      %28 = vector.broadcast %27 : vector<1x32xf32> to vector<8x32xf32>
      %29 = arith.mulf %26, %28 : vector<8x32xf32>
      %c0_17 = arith.constant 0 : index
      %c0_18 = arith.constant 0 : index
      %30 = vector.load %arg4[%c0_17, %c0_18] : memref<1x32xf32, #tpu.memory_space<vmem>>, vector<1x32xf32>
      %31 = vector.broadcast %30 : vector<1x32xf32> to vector<8x32xf32>
      %32 = arith.addf %29, %31 : vector<8x32xf32>
      %c0_19 = arith.constant 0 : index
      %c0_20 = arith.constant 0 : index
      %33 = vector.load %arg8[%c0_19, %c0_20] : memref<8x32xf32, #tpu.memory_space<vmem>>, vector<8x32xf32>
      tpu.vector_store %arg8[%c0_19, %c0_20], %32 {strides = array<i32>} : memref<8x32xf32, #tpu.memory_space<vmem>>, vector<8x32xf32>,
    } else {
    }
    %c0 = arith.constant 0 : index
    %c0_1 = arith.constant 0 : index
    %3 = vector.load %arg8[%c0, %c0_1] : memref<8x32xf32, #tpu.memory_space<vmem>>, vector<8x32xf32>
    %c0_2 = arith.constant 0 : index
    %c0_3 = arith.constant 0 : index
    %4 = vector.load %arg5[%c0_2, %c0_3] : memref<32x16xf32, #tpu.memory_space<vmem>>, vector<32x16xf32>
    %cst = arith.constant dense<0.000000e+00> : vector<8x16xf32>
    %5 = tpu.matmul %3, %4, %cst {dimension_numbers = #tpu.dot_dimension_numbers<[1], [0], [0], [1], [0, 0, 1, 1], [], []>} : vector<8x32xf32>, vector<32x16xf32>, vector<8x16xf32> -> vector<8x16xf32>
    %c0_4 = arith.constant 0 : index
    %c0_5 = arith.constant 0 : index
    %6 = vector.load %arg6[%c0_4, %c0_5] : memref<1x16xf32, #tpu.memory_space<vmem>>, vector<1x16xf32>
    %7 = vector.broadcast %6 : vector<1x16xf32> to vector<8x16xf32>
    %8 = arith.addf %5, %7 : vector<8x16xf32>
    %c0_6 = arith.constant 0 : index
    %c0_7 = arith.constant 0 : index
    %9 = vector.load %arg7[%c0_6, %c0_7] : memref<8x16xf32, #tpu.memory_space<vmem>>, vector<8x16xf32>
    tpu.vector_store %arg7[%c0_6, %c0_7], %8 {strides = array<i32>} : memref<8x16xf32, #tpu.memory_space<vmem>>, vector<8x16xf32>,
    return
  }
  func.func @transform_0(%arg0: i32, %arg1: i32) -> (i32, i32) {
    %c0_i32 = arith.constant 0 : i32
    %c0_i32_0 = arith.constant 0 : i32
    return %arg0, %c0_i32 : i32, i32
  }
  func.func @transform_1(%arg0: i32, %arg1: i32) -> (i32, i32) {
    %c0_i32 = arith.constant 0 : i32
    %c0_i32_0 = arith.constant 0 : i32
    %c0_i32_1 = arith.constant 0 : i32
    return %c0_i32, %c0_i32_0 : i32, i32
  }
  func.func @transform_2(%arg0: i32, %arg1: i32) -> (i32, i32) {
    %c0_i32 = arith.constant 0 : i32
    %c0_i32_0 = arith.constant 0 : i32
    %c0_i32_1 = arith.constant 0 : i32
    return %c0_i32, %c0_i32_0 : i32, i32
  }
  func.func @transform_3(%arg0: i32, %arg1: i32) -> (i32, i32) {
    %c0_i32 = arith.constant 0 : i32
    %c0_i32_0 = arith.constant 0 : i32
    return %c0_i32, %arg1 : i32, i32
  }
  func.func @transform_4(%arg0: i32, %arg1: i32) -> (i32, i32) {
    %c0_i32 = arith.constant 0 : i32
    %c0_i32_0 = arith.constant 0 : i32
    return %c0_i32, %arg1 : i32, i32
  }
  func.func @transform_5(%arg0: i32, %arg1: i32) -> (i32, i32) {
    %c0_i32 = arith.constant 0 : i32
    return %arg0, %arg1 : i32, i32
  }
}

</mosaic_0001>

<llo_original>
// kernel: tpu_custom_call.1
$region0: #{tpu_custom_call.1}
  #allocation0 [shape = 'u32[]', space=smem, size = 0x4, offset = 0x4, fixed_abs, tag = 'smem constant byte address 0x4 - core index']
  #allocation1 [shape = 'u32[144,128]{1,0:T(1,128)}', space=vmem, size = 0x12000, scoped, tag = 'internal scratch']
  #allocation2 [shape = 'f32[8,32]{1,0:T(8,128)}', space=vmem, size = 0x1000, scoped, tag = 'scratch operand']
  %s0 = inlined_call_operand.vmem [shape: f32[16,32], index: 0, kind: input, shape index: {}]
  %s1 = inlined_call_operand.vmem [shape: f32[1,32], index: 1, kind: input, shape index: {}]
  %s2 = inlined_call_operand.vmem [shape: f32[1,32], index: 2, kind: input, shape index: {}]
  %s3 = inlined_call_operand.vmem [shape: f32[32,16], index: 3, kind: input, shape index: {}]
  %s4 = inlined_call_operand.vmem [shape: f32[1,16], index: 4, kind: input, shape index: {}]
  %s5 = inlined_call_operand.hbm [shape: f32[16,16], index: 5, kind: output, shape index: {}]
  %s6 = sld [smem:[#allocation0]]
  $region57: #{tpu_custom_call.1} parent=0
    _
  %s8 = ssub.s32 1, %s6
  %s9 = scalar_select 0, %s8, %s6
  $region1: #{tpu_custom_call.1} parent=0
    #allocation3 [shape = 'u8[8192]{0}', space=vmem, size = 0x2000, scoped, tag = 'output window, operand 0']
    #allocation4 [shape = 's32[2]{0}', space=sflag, size = 0x8, scoped, tag = 'scoped memory for tpu_custom_call.1']
    %10 = vsyncpa [#allocation4], 0
    %s11 = scalar_lea.sflag [#allocation4], 1
    %12 = vsyncpa %s11, 0
    loop: start=0, step=1, limit=4
    $region2: #{tpu_custom_call.1} parent=1 // loop_pre_header
      _
    $region3: #{tpu_custom_call.1} parent=1 // loop_header
      %s14 = sphi 0, %s18
      %p15 = scmp.ge.s32.totalorder %s14, 4
      %s21 = sphi 0, %s33
      %s22 = sphi 0, %s29
      %s23 = sphi 0, %s21
      %s24 = sphi 0, %s22
      %s25 = sphi 0, %s23
      %s26 = sphi 0, %s24
      %s36 = sphi 0, %s38
      %s39 = sphi 0, %s36
      %s40 = sphi 0, %s39
      %s56 = sphi 0, %s40
      %s60 = sphi 0, %s60
      %s62 = sphi 0, %s60
      %s63 = sphi 0, %s62
      %s77 = sphi 0, %s63
      %s81 = sphi 0, %s81
      %s83 = sphi 0, %s81
      %s84 = sphi 0, %s83
      %s98 = sphi 0, %s84
      %s104 = sphi 0, %s106
      %s107 = sphi 0, %s104
      %s108 = sphi 0, %s107
      %s124 = sphi 0, %s108
      %s130 = sphi 0, %s132
      %s133 = sphi 0, %s130
      %s134 = sphi 0, %s133
      %s150 = sphi 0, %s134
      %s158 = sphi 0, %s160
      %s161 = sphi 0, %s158
      %s162 = sphi 0, %s161
      %s178 = sphi 0, %s162
    $region4: #{tpu_custom_call.1} parent=1 // loop_header_branch
      %17 = sbr.rel (%p15) target = $region8
    $region5: #{tpu_custom_call.1} parent=1 // loop_body
      %s19 = ssub.s32 %s14, 1
      %s20 = ssub.s32 %s14, 2
      %s27 = sadd.s32 1, %s22
      %p28 = scmp.ge.s32.totalorder %s27, 1
      %s29 = scalar_select %p28, 0, %s27
      %s30 = sadd.s32 1, %s21
      %s31 = scalar_select %p28, %s30, %s21
      %p32 = scmp.ge.s32.totalorder %s31, 2
      %s33 = scalar_select %p32, 0, %s31
      %s34 = ssub.s32 %s21, %s33
      %p35 = scmp.eq.s32.totalorder %s34, 0
      %s37 = sadd.s32 %s36, 1
      %s38 = scalar_select %p35, %s36, %s37
      %p41 = pneg %p35
      %p42 = scmp.eq.s32.totalorder %s14, 1
      %p43 = por %p41, %p42
      %p44 = scmp.ne.s32.totalorder %s36, %s39
      %p45 = scmp.eq.s32.totalorder %s14, 0
      %p46 = por %p44, %p45
      %p47 = scmp.ne.s32.totalorder %s36, %s39
      %p48 = scmp.eq.s32.totalorder %s19, 1
      %p49 = por %p47, %p48
      %p50 = scmp.ne.s32.totalorder %s39, %s40
      %p51 = scmp.eq.s32.totalorder %s19, 0
      %p52 = por %p50, %p51
      %p53 = scmp.ne.s32.totalorder %s39, %s40
      %p54 = scmp.eq.s32.totalorder %s20, 1
      %p55 = por %p53, %p54
      %p57 = scmp.ne.s32.totalorder %s40, %s56
      %p58 = scmp.eq.s32.totalorder %s20, 0
      %p59 = por %p57, %p58
      %s61 = sadd.s32 %s60, 1
      %p64 = scmp.eq.s32.totalorder %s14, 1
      %p65 = scmp.ne.s32.totalorder %s60, %s62
      %p66 = scmp.eq.s32.totalorder %s14, 0
      %p67 = por %p65, %p66
      %p68 = scmp.ne.s32.totalorder %s60, %s62
      %p69 = scmp.eq.s32.totalorder %s19, 1
      %p70 = por %p68, %p69
      %p71 = scmp.ne.s32.totalorder %s62, %s63
      %p72 = scmp.eq.s32.totalorder %s19, 0
      %p73 = por %p71, %p72
      %p74 = scmp.ne.s32.totalorder %s62, %s63
      %p75 = scmp.eq.s32.totalorder %s20, 1
      %p76 = por %p74, %p75
      %p78 = scmp.ne.s32.totalorder %s63, %s77
      %p79 = scmp.eq.s32.totalorder %s20, 0
      %p80 = por %p78, %p79
      %s82 = sadd.s32 %s81, 1
      %p85 = scmp.eq.s32.totalorder %s14, 1
      %p86 = scmp.ne.s32.totalorder %s81, %s83
      %p87 = scmp.eq.s32.totalorder %s14, 0
      %p88 = por %p86, %p87
      %p89 = scmp.ne.s32.totalorder %s81, %s83
      %p90 = scmp.eq.s32.totalorder %s19, 1
      %p91 = por %p89, %p90
      %p92 = scmp.ne.s32.totalorder %s83, %s84
      %p93 = scmp.eq.s32.totalorder %s19, 0
      %p94 = por %p92, %p93
      %p95 = scmp.ne.s32.totalorder %s83, %s84
      %p96 = scmp.eq.s32.totalorder %s20, 1
      %p97 = por %p95, %p96
      %p99 = scmp.ne.s32.totalorder %s84, %s98
      %p100 = scmp.eq.s32.totalorder %s20, 0
      %p101 = por %p99, %p100
      %s102 = ssub.s32 %s22, %s29
      %p103 = scmp.eq.s32.totalorder %s102, 0
      %s105 = sadd.s32 %s104, 1
      %s106 = scalar_select %p103, %s104, %s105
      %p109 = pneg %p103
      %p110 = scmp.eq.s32.totalorder %s14, 1
      %p111 = por %p109, %p110
      %p112 = scmp.ne.s32.totalorder %s104, %s107
      %p113 = scmp.eq.s32.totalorder %s14, 0
      %p114 = por %p112, %p113
      %p115 = scmp.ne.s32.totalorder %s104, %s107
      %p116 = scmp.eq.s32.totalorder %s19, 1
      %p117 = por %p115, %p116
      %p118 = scmp.ne.s32.totalorder %s107, %s108
      %p119 = scmp.eq.s32.totalorder %s19, 0
      %p120 = por %p118, %p119
      %p121 = scmp.ne.s32.totalorder %s107, %s108
      %p122 = scmp.eq.s32.totalorder %s20, 1
      %p123 = por %p121, %p122
      %p125 = scmp.ne.s32.totalorder %s108, %s124
      %p126 = scmp.eq.s32.totalorder %s20, 0
      %p127 = por %p125, %p126
      %s128 = ssub.s32 %s22, %s29
      %p129 = scmp.eq.s32.totalorder %s128, 0
      %s131 = sadd.s32 %s130, 1
      %s132 = scalar_select %p129, %s130, %s131
      %p135 = pneg %p129
      %p136 = scmp.eq.s32.totalorder %s14, 1
      %p137 = por %p135, %p136
      %p138 = scmp.ne.s32.totalorder %s130, %s133
      %p139 = scmp.eq.s32.totalorder %s14, 0
      %p140 = por %p138, %p139
      %p141 = scmp.ne.s32.totalorder %s130, %s133
      %p142 = scmp.eq.s32.totalorder %s19, 1
      %p143 = por %p141, %p142
      %p144 = scmp.ne.s32.totalorder %s133, %s134
      %p145 = scmp.eq.s32.totalorder %s19, 0
      %p146 = por %p144, %p145
      %p147 = scmp.ne.s32.totalorder %s133, %s134
      %p148 = scmp.eq.s32.totalorder %s20, 1
      %p149 = por %p147, %p148
      %p151 = scmp.ne.s32.totalorder %s134, %s150
      %p152 = scmp.eq.s32.totalorder %s20, 0
      %p153 = por %p151, %p152
      %s154 = ssub.s32 %s21, %s33
      %s155 = ssub.s32 %s22, %s29
      %s156 = sor.u32 %s154, %s155
      %p157 = scmp.eq.s32.totalorder %s156, 0
      %s159 = sadd.s32 %s158, 1
      %s160 = scalar_select %p157, %s158, %s159
      %p163 = pneg %p157
      %p164 = scmp.eq.s32.totalorder %s14, 1
      %p165 = por %p163, %p164
      %p166 = scmp.ne.s32.totalorder %s158, %s161
      %p167 = scmp.eq.s32.totalorder %s14, 0
      %p168 = por %p166, %p167
      %p169 = scmp.ne.s32.totalorder %s158, %s161
      %p170 = scmp.eq.s32.totalorder %s19, 1
      %p171 = por %p169, %p170
      %p172 = scmp.ne.s32.totalorder %s161, %s162
      %p173 = scmp.eq.s32.totalorder %s19, 0
      %p174 = por %p172, %p173
      %p175 = scmp.ne.s32.totalorder %s161, %s162
      %p176 = scmp.eq.s32.totalorder %s20, 1
      %p177 = por %p175, %p176
      %p179 = scmp.ne.s32.totalorder %s162, %s178
      %p180 = scmp.eq.s32.totalorder %s20, 0
      %p181 = por %p179, %p180
      %p182 = scmp.le.s32.totalorder 1, %s14
      %p183 = scmp.lt.s32.totalorder %s14, 3
      %p184 = pnand %p182, %p183
      %p185 = pneg %p184
      // Predicated region
      $region9: #{tpu_custom_call.1} parent=5 // pred_check
        _
      $region10: #{tpu_custom_call.1} parent=5 // pred_check_branch
        %187 = sbr.rel (%p184) target = $region12
      $region11: #{tpu_custom_call.1} parent=5 // pred_region
        %s188 = ssub.s32 %s14, 1
        // Predicated region
        $region13: #{tpu_custom_call.1} parent=11 // pred_check
          %p189 = pneg %p73
        $region14: #{tpu_custom_call.1} parent=11 // pred_check_branch
          %191 = sbr.rel (%p189) target = $region16
        $region15: #{tpu_custom_call.1} parent=11 // pred_region
          _
        $region16: #{tpu_custom_call.1} parent=11 // pred_fallthru
          _
        // Predicated region
        $region17: #{tpu_custom_call.1} parent=11 // pred_check
          %p192 = pneg %p94
        $region18: #{tpu_custom_call.1} parent=11 // pred_check_branch
          %194 = sbr.rel (%p192) target = $region20
        $region19: #{tpu_custom_call.1} parent=11 // pred_region
          _
        $region20: #{tpu_custom_call.1} parent=11 // pred_fallthru
          _
        // Predicated region
        $region21: #{tpu_custom_call.1} parent=11 // pred_check
          %p195 = pneg %p120
        $region22: #{tpu_custom_call.1} parent=11 // pred_check_branch
          %197 = sbr.rel (%p195) target = $region24
        $region23: #{tpu_custom_call.1} parent=11 // pred_region
          %p198 = scmp.lt.s32.totalorder %s24, 0
          %s199 = scalar_select %p198, %s24, 0
          %s200 = smul.addr %s199, 8
          %s201 = scalar_lea.vmem %s3, %s200
        $region24: #{tpu_custom_call.1} parent=11 // pred_fallthru
          _
        // Predicated region
        $region25: #{tpu_custom_call.1} parent=11 // pred_check
          %p202 = pneg %p146
        $region26: #{tpu_custom_call.1} parent=11 // pred_check_branch
          %204 = sbr.rel (%p202) target = $region28
        $region27: #{tpu_custom_call.1} parent=11 // pred_region
          %p205 = scmp.lt.s32.totalorder %s24, 0
          %s206 = scalar_select %p205, %s24, 0
          %s207 = scalar_lea.vmem %s4, %s206
        $region28: #{tpu_custom_call.1} parent=11 // pred_fallthru
          _
      $region12: #{tpu_custom_call.1} parent=5 // pred_fallthru
        _
      %p208 = scmp.lt.s32.totalorder %s14, 2
      // Predicated region
      $region29: #{tpu_custom_call.1} parent=5 // pred_check
        %p209 = pneg %p208
      $region30: #{tpu_custom_call.1} parent=5 // pred_check_branch
        %211 = sbr.rel (%p209) target = $region32
      $region31: #{tpu_custom_call.1} parent=5 // pred_region
        // Predicated region
        $region33: #{tpu_custom_call.1} parent=31 // pred_check
          %p212 = pneg %p46
        $region34: #{tpu_custom_call.1} parent=31 // pred_check_branch
          %214 = sbr.rel (%p212) target = $region36
        $region35: #{tpu_custom_call.1} parent=31 // pred_region
          %p215 = scmp.lt.s32.totalorder %s21, 1
          %s216 = scalar_select %p215, %s21, 1
          %s217 = smul.addr %s216, 8
          %s218 = scalar_lea.vmem %s0, %s217
        $region36: #{tpu_custom_call.1} parent=31 // pred_fallthru
          _
      $region32: #{tpu_custom_call.1} parent=5 // pred_fallthru
        _
      %p219 = scmp.le.s32.totalorder 1, %s14
      %p220 = scmp.lt.s32.totalorder %s14, 3
      %p221 = pnand %p219, %p220
      %p222 = pneg %p221
      // Predicated region
      $region37: #{tpu_custom_call.1} parent=5 // pred_check
        _
      $region38: #{tpu_custom_call.1} parent=5 // pred_check_branch
        %224 = sbr.rel (%p221) target = $region40
      $region39: #{tpu_custom_call.1} parent=5 // pred_region
        %s225 = ssub.s32 %s14, 1
        %p226 = scmp.lt.s32.totalorder %s23, 1
        %s227 = scalar_select %p226, %s23, 1
        %s228 = smul.addr %s227, 8
        %s229 = scalar_lea.vmem %s0, %s228
        %p230 = pneg %p52
        %p231 = pneg %p49
        %p232 = pneg %p73
        %p233 = pneg %p70
        %p234 = pneg %p94
        %p235 = pneg %p91
        %p236 = scmp.lt.s32.totalorder %s24, 0
        %s237 = scalar_select %p236, %s24, 0
        %s238 = smul.addr %s237, 8
        %s239 = scalar_lea.vmem %s3, %s238
        %p240 = pneg %p120
        %p241 = pneg %p117
        %p242 = scmp.lt.s32.totalorder %s24, 0
        %s243 = scalar_select %p242, %s24, 0
        %s244 = scalar_lea.vmem %s4, %s243
        %p245 = pneg %p146
        %p246 = pneg %p143
        %p247 = pneg %p174
        %p248 = pneg %p171
        %s249 = sand.u32 %s161, 1
        %s250 = scalar_lea.sflag [#allocation4], %s249
        %s251 = sand.u32 %s161, 1
        %s252 = smul.addr %s251, 8
        %s253 = scalar_lea.vmem [#allocation3], %s252
        %p254 = scmp.lt.s32.totalorder %s23, 1
        %s255 = scalar_select %p254, %s23, 1
        %s256 = smul.addr %s255, 8
        %s257 = scalar_lea.vmem %s0, %s256
        %p258 = scmp.lt.s32.totalorder %s24, 0
        %s259 = scalar_select %p258, %s24, 0
        %s260 = smul.addr %s259, 8
        %s261 = scalar_lea.vmem %s3, %s260
        %p262 = scmp.lt.s32.totalorder %s24, 0
        %s263 = scalar_select %p262, %s24, 0
        %s264 = scalar_lea.vmem %s4, %s263
        %p265 = scmp.eq.s32.totalorder %s24, 0
        // Predicated region
        $region41: #{tpu_custom_call.1} parent=39 // pred_check
          %p266 = pneg %p265
        $region42: #{tpu_custom_call.1} parent=39 // pred_check_branch
          %268 = sbr.rel (%p266) target = $region44
        $region43: #{tpu_custom_call.1} parent=39 // pred_region
          %v269 = vld [vmem:[%s257] sm:$0xff]
          %vm270 = vcmask 261120
          %v271 = vsel %vm270, %v269, 0.0
          %272 = vadd.xlane.f32.xlu0 %v271
          %v273 = vpop.xlane.xlu0 %272
          %v274 = vrcp.pop 32.0
          %v275 = vmul.f32 %v273, %v274
          %v276 = vsub.f32 %v269, %v275
          %v277 = vmul.f32 %v276, %v276
          %v278 = vsel %vm270, %v277, 0.0
          %279 = vadd.xlane.f32.xlu0 %v278
          %v280 = vpop.xlane.xlu0 %279
          %v281 = vmul.f32 %v280, %v274
          %v282 = vadd.f32 %v281, 1e-05
          %v283 = vrsqrt.pop %v282
          %v284 = vmul.f32 %v276, %v283
          %v285 = vld [vmem:[%s1] sm:$0x1]
          %v287 = vlaneseq
          %v288 = vshrl.u32 %v287, 7
          %v289 = vsub.s32 0, %v288
          %v290 = vrot.slane %v285, %v289
          %v292 = vmul.f32 %v284, %v290
          %v293 = vld [vmem:[%s2] sm:$0x1]
          %v295 = vlaneseq
          %v296 = vshrl.u32 %v295, 7
          %v297 = vsub.s32 0, %v296
          %v298 = vrot.slane %v293, %v297
          %v300 = vadd.f32 %v292, %v298
          %301 = vst.msk [vmem:[#allocation2] sm:$0xff] %vm270, %v300
        $region44: #{tpu_custom_call.1} parent=39 // pred_fallthru
          _
        %v302 = vld [vmem:[#allocation2] sm:$0xff]
        %v303 = vld [vmem:[%s261] sm:$0xff]
        %v304 = vld [vmem:[%s261 + $0x8] sm:$0xff]
        %v305 = vld [vmem:[%s261 + $0x10] sm:$0xff]
        %v306 = vld [vmem:[%s261 + $0x18] sm:$0xff]
        %v307 = vld [vmem:[%s264] sm:$0x1]
        %v309 = vlaneseq
        %v310 = vshrl.u32 %v309, 7
        %v311 = vsub.s32 0, %v310
        %v312 = vrot.slane %v307, %v311
        %vm314 = vcmask 261120
        %v316 = vsel %vm314, %v302, 0
        %318 = vmatprep.subr.mxu0 0.0
        %319 = vmatpush1.msra.mxu0 0.0
        %320 = vmatprep.subr.mxu0 0.0
        %321 = vmatpush1.msra.mxu0 0.0
        %322 = vmatprep.subr.mxu0 0.0
        %323 = vmatpush1.msra.mxu0 0.0
        %324 = vmatprep.subr.mxu0 0.0
        %325 = vmatpush1.msra.mxu0 0.0
        %326 = vmatprep.subr.mxu0 0.0
        %327 = vmatpush1.msra.mxu0 0.0
        %328 = vmatprep.subr.mxu0 0.0
        %329 = vmatpush1.msra.mxu0 0.0
        %330 = vmatprep.subr.mxu0 0.0
        %331 = vmatpush1.msra.mxu0 0.0
        %332 = vmatprep.subr.mxu0 0.0
        %333 = vmatpush1.msra.mxu0 0.0
        %334 = vmatprep.subr.mxu0 0.0
        %335 = vmatpush1.msra.mxu0 0.0
        %336 = vmatprep.subr.mxu0 0.0
        %337 = vmatpush1.msra.mxu0 0.0
        %338 = vmatprep.subr.mxu0 0.0
        %339 = vmatpush1.msra.mxu0 0.0
        %340 = vmatprep.subr.mxu0 0.0
        %341 = vmatpush1.msra.mxu0 0.0
        %342 = vmatprep.subr.mxu0 0.0
        %343 = vmatpush1.msra.mxu0 %v306
        %344 = vmatprep.subr.mxu0 0.0
        %345 = vmatpush1.msra.mxu0 %v305
        %346 = vmatprep.subr.mxu0 0.0
        %347 = vmatpush1.msra.mxu0 %v304
        %348 = vmatprep.subr.mxu0 0.0
        %349 = vmatpush1.msra.mxu0 %v303
        %350 = vmatprep.subr.mxu0 0.0
        %351 = vmatpush2.msra.mxu0 0.0
        %352 = vmatprep.subr.mxu0 0.0
        %353 = vmatpush2.msra.mxu0 0.0
        %354 = vmatprep.subr.mxu0 0.0
        %355 = vmatpush2.msra.mxu0 0.0
        %356 = vmatprep.subr.mxu0 0.0
        %357 = vmatpush2.msra.mxu0 0.0
        %358 = vmatprep.subr.mxu0 0.0
        %359 = vmatpush2.msra.mxu0 0.0
        %360 = vmatprep.subr.mxu0 0.0
        %361 = vmatpush2.msra.mxu0 0.0
        %362 = vmatprep.subr.mxu0 0.0
        %363 = vmatpush2.msra.mxu0 0.0
        %364 = vmatprep.subr.mxu0 0.0
        %365 = vmatpush2.msra.mxu0 0.0
        %366 = vmatprep.subr.mxu0 0.0
        %367 = vmatpush2.msra.mxu0 0.0
        %368 = vmatprep.subr.mxu0 0.0
        %369 = vmatpush2.msra.mxu0 0.0
        %370 = vmatprep.subr.mxu0 0.0
        %371 = vmatpush2.msra.mxu0 0.0
        %372 = vmatprep.subr.mxu0 0.0
        %373 = vmatpush2.msra.mxu0 0.0
        %374 = vmatprep.subr.mxu0 0.0
        %375 = vmatpush2.msra.mxu0 0.0
        %376 = vmatprep.subr.mxu0 0.0
        %377 = vmatpush2.msra.mxu0 0.0
        %378 = vmatprep.subr.mxu0 0.0
        %379 = vmatpush2.msra.mxu0 0.0
        %380 = vmatprep.subr.mxu0 0.0
        %381 = vmatpush2.msra.mxu0 0.0
        %382 = vmatprep.mubr.f32.mxu0 0.0
        %383 = vmatmul.mubr.f32.gmra.mxu0 %v316
        %v384 = vpop.f32.mrf.mxu0
        %v385 = vadd.f32 %v312, %v384
        %v386 = vpop.f32.mrf.mxu0
        %387 = vdwg.mxu0
        %vm388 = vcmask 130048
        %389 = vst.msk [vmem:[%s253] sm:$0xff] %vm388, %v385
        %s390 = sand.u32 %s161, 1
        %s391 = scalar_lea.sflag [#allocation4], %s390
        %s392 = sand.u32 %s161, 1
        %s393 = smul.addr %s392, 8
        %s394 = scalar_lea.vmem [#allocation3], %s393
        // Predicated region
        $region45: #{tpu_custom_call.1} parent=39 // pred_check
          %p395 = pneg %p171
        $region46: #{tpu_custom_call.1} parent=39 // pred_check_branch
          %397 = sbr.rel (%p395) target = $region48
        $region47: #{tpu_custom_call.1} parent=39 // pred_region
          %s399 = ssub.s32 128, 128
          %400 = vsyncadd %s391, %s399
          %s401 = sadd.s32 %s24, %s23
          %s402 = smul.addr %s401, 128
          %s403 = scalar_lea.hbm %s5, %s402
          %s405 = sshll.u32 %s394, 4
          %s406 = int_to_ptr.vmem [resolvable:$true] %s405
          %408 = dma.vmem_to_hbm [thread:$0]  %s406, 128, %s403, %s391
        $region48: #{tpu_custom_call.1} parent=39 // pred_fallthru
          _
      $region40: #{tpu_custom_call.1} parent=5 // pred_fallthru
        _
      %p409 = scmp.le.s32.totalorder 2, %s14
      // Predicated region
      $region49: #{tpu_custom_call.1} parent=5 // pred_check
        %p410 = pneg %p409
      $region50: #{tpu_custom_call.1} parent=5 // pred_check_branch
        %412 = sbr.rel (%p410) target = $region52
      $region51: #{tpu_custom_call.1} parent=5 // pred_region
        %s413 = ssub.s32 %s14, 2
        // Predicated region
        $region53: #{tpu_custom_call.1} parent=51 // pred_check
          %p414 = pneg %p177
        $region54: #{tpu_custom_call.1} parent=51 // pred_check_branch
          %416 = sbr.rel (%p414) target = $region56
        $region55: #{tpu_custom_call.1} parent=51 // pred_region
          %s417 = sand.u32 %s162, 1
          %s418 = scalar_lea.sflag [#allocation4], %s417
          %s419 = sand.u32 %s162, 1
          %s420 = smul.addr %s419, 8
          %s421 = scalar_lea.vmem [#allocation3], %s420
          %422 = dma.done %s418, 128
        $region56: #{tpu_custom_call.1} parent=51 // pred_fallthru
          _
      $region52: #{tpu_custom_call.1} parent=5 // pred_fallthru
        _
    $region6: #{tpu_custom_call.1} parent=1 // loop_footer
      %s18 = sadd.s32 1, %s14
    $region7: #{tpu_custom_call.1} parent=1 // loop_footer_branch
      %13 = sbr.rel target = $region3
    $region8: #{tpu_custom_call.1} parent=1 // loop_exit
      _
    %423 = vsyncpa [#allocation4], 1
    %s424 = scalar_lea.sflag [#allocation4], 1
    %425 = vsyncpa %s424, 1

</llo_original>
